<compile_context>
chip_gen: v5e
topology: v5e:2x2
jax: 0.10.0
libtpu: 0.0.40
codegen_flags: <defaults>
</compile_context>

<pallas_src>
import functools

import jax
import jax.numpy as jnp
from jax.experimental import pallas as pl
from jax.experimental.pallas import tpu as pltpu


_TARGET_BLOCK_BYTES = 4 * 1024 * 1024      # ~4 MiB f32 per data-array block
_VMEM_LIMIT_BYTES = 48 * 1024 * 1024       # 2 in + 2 out, double buffered, + headroom


def _round_up(x, m):
    return ((x + m - 1) // m) * m


def _choose_tiles(rows, cols):
    """Pick (tile_r, tile_c) for f32 blocks of roughly _TARGET_BLOCK_BYTES."""
    target_elems = _TARGET_BLOCK_BYTES // 4

    # Prefer full-width (contiguous) column blocks; only split columns when even
    # an 8-row full-width block would be far above the per-block target.
    if cols * 8 <= 2 * target_elems:
        tile_c = cols
    else:
        tile_c = max(128, ((target_elems // 8) // 128) * 128)

    tile_r = max(8, (max(1, target_elems // tile_c) // 8) * 8)
    if tile_r >= rows:
        tile_r = rows                      # full first dim: no (8, .) constraint

    # Expose >= 2 blocks so v7x's two TensorCores both get work (costs at most
    # one extra ~0.35 us grid step on single-core chips).
    if pl.cdiv(rows, tile_r) * pl.cdiv(cols, tile_c) < 2:
        if rows >= 16:
            tile_r = max(8, _round_up(pl.cdiv(rows, 2), 8))
        elif tile_c >= 256:
            tile_c = max(128, _round_up(pl.cdiv(tile_c, 2), 128))
    return tile_r, tile_c


def _dropout2d_kernel(scale_ref, xr_ref, xi_ref, or_ref, oi_ref):
    """Scale the real and imaginary planes by the shared per-channel scale."""
    s = scale_ref[...]                     # (tile_r, 1), broadcast along lanes
    or_ref[...] = xr_ref[...] * s
    oi_ref[...] = xi_ref[...] * s


@functools.partial(jax.jit, static_argnames=("p", "training"))
def complex_dropout2d(inp, key, p=0.5, training=True):
    """JAX/Pallas equivalent of the PyTorch complex_dropout2d (forward).

    inp: complex64 array of shape [B, C, H, W] (NCHW).
    key: jax.random key driving the per-channel dropout mask.
    """
    if p < 0 or p > 1:
        raise ValueError(
            "dropout probability has to be between 0 and 1, but got {}".format(p)
        )
    if not training or p == 0.0:
        return inp
    if p == 1.0:
        # TODO(synk): the PyTorch reference divides by (1 - p) at p == 1 and
        # produces NaNs; we return the dropout2d limit (all zeros) instead.
        return jnp.zeros_like(inp)

    b, c, h, w = inp.shape
    rows, cols = b * c, h * w

    # Per-(b, c) keep mask -> per-row scale in {0, 1/(1-p)^2}.  Tiny (B*C elems),
    # generated with the functional JAX PRNG outside the kernel.
    # NOTE: 1/(1-p)^2 faithfully reproduces the reference module's double
    # scaling (F.dropout2d's internal 1/(1-p) times the module's extra 1/(1-p)).
    keep = jax.random.bernoulli(key, 1.0 - p, (rows,))
    scale_val = 1.0 / ((1.0 - p) * (1.0 - p))
    scales = jnp.where(keep, jnp.float32(scale_val), jnp.float32(0.0)).reshape(rows, 1)

    x_real = jnp.real(inp).astype(jnp.float32).reshape(rows, cols)
    x_imag = jnp.imag(inp).astype(jnp.float32).reshape(rows, cols)

    tile_r, tile_c = _choose_tiles(rows, cols)
    grid = (pl.cdiv(rows, tile_r), pl.cdiv(cols, tile_c))

    data_spec = pl.BlockSpec((tile_r, tile_c), lambda i, j: (i, j))
    out_r, out_i = pl.pallas_call(
        _dropout2d_kernel,
        out_shape=(
            jax.ShapeDtypeStruct((rows, cols), jnp.float32),
            jax.ShapeDtypeStruct((rows, cols), jnp.float32),
        ),
        grid=grid,
        in_specs=[
            pl.BlockSpec((tile_r, 1), lambda i, j: (i, 0)),  # scale: resident in j
            data_spec,                                       # real plane
            data_spec,                                       # imag plane
        ],
        out_specs=[data_spec, data_spec],
        input_output_aliases={1: 0, 2: 1},   # outputs reuse the real/imag buffers
        compiler_params=pltpu.CompilerParams(
            dimension_semantics=("parallel", "parallel"),
            vmem_limit_bytes=_VMEM_LIMIT_BYTES,
        ),
    )(scales, x_real, x_imag)

    out = jax.lax.complex(out_r.reshape(b, c, h, w), out_i.reshape(b, c, h, w))
    return out.astype(inp.dtype)


class ComplexDropout2D:
    def __init__(self, p=0.5, inplace=False):
        if p < 0 or p > 1:
            raise ValueError(
                "dropout probability has to be between 0 and 1, but got {}".format(p)
            )
        self.p = p
        self.inplace = inplace   # no-op in JAX (purely functional)
        self.training = True

    def __call__(self, inp, key):
        if not self.training:
            return inp
        return complex_dropout2d(inp, key, p=self.p, training=True)


if __name__ == "__main__":
    key = jax.random.PRNGKey(0)
    k_real, k_imag, k_drop = jax.random.split(key, 3)

    B, C, H, W = 2, 4, 16, 16
    x_real = jax.random.normal(k_real, (B, C, H, W), dtype=jnp.float32)
    x_imag = jax.random.normal(k_imag, (B, C, H, W), dtype=jnp.float32)
    x = jax.lax.complex(x_real, x_imag)          # complex64, [2, 4, 16, 16]

    P = 0.5
    layer = ComplexDropout2D(p=P)
    out = jax.block_until_ready(layer(x, k_drop))

    # Sanity checks: shape/dtype preserved; each (b, c) plane is either all-zero
    # or equal to scale * input, with the SAME mask on real and imaginary parts.
    assert out.shape == x.shape and out.dtype == x.dtype
    scale = 1.0 / ((1.0 - P) ** 2)
    o_r = jnp.real(out).reshape(B * C, H * W)
    o_i = jnp.imag(out).reshape(B * C, H * W)
    i_r = x_real.reshape(B * C, H * W)
    i_i = x_imag.reshape(B * C, H * W)
    zero_r = jnp.all(jnp.abs(o_r) < 1e-6, axis=1)
    zero_i = jnp.all(jnp.abs(o_i) < 1e-6, axis=1)
    kept_r = jnp.all(jnp.abs(o_r - scale * i_r) < 1e-4, axis=1)
    kept_i = jnp.all(jnp.abs(o_i - scale * i_i) < 1e-4, axis=1)
    assert bool(jnp.all(zero_r | kept_r))
    assert bool(jnp.all(zero_i | kept_i))
    assert bool(jnp.all(zero_r == zero_i))       # identical channel mask on both parts

    print("KERNEL_OK")
</pallas_src>

<mosaic_0001>
module attributes {stable_mosaic.version = 11 : i64} {
  func.func @_dropout2d_kernel(%arg0: i32, %arg1: i32, %arg2: memref<8x1xf32, #tpu.memory_space<vmem>>, %arg3: memref<8x128xf32, #tpu.memory_space<vmem>>, %arg4: memref<8x128xf32, #tpu.memory_space<vmem>>, %arg5: memref<8x128xf32, #tpu.memory_space<vmem>>, %arg6: memref<8x128xf32, #tpu.memory_space<vmem>>) attributes {dimension_semantics = [#tpu.dimension_semantics<parallel>, #tpu.dimension_semantics<parallel>], iteration_bounds = array<i64: 1, 2>, scalar_prefetch = 0 : i64, scratch_operands = 0 : i64, tpu.core_type = #tpu.core_type<tc>, window_params = [{transform_indices = @transform_0, window_bounds = array<i64: 8, 1>}, {transform_indices = @transform_1, window_bounds = array<i64: 8, 128>}, {transform_indices = @transform_2, window_bounds = array<i64: 8, 128>}, {transform_indices = @transform_3, window_bounds = array<i64: 8, 128>}, {transform_indices = @transform_4, window_bounds = array<i64: 8, 128>}]} {
    %c0 = arith.constant 0 : index
    %c0_0 = arith.constant 0 : index
    %0 = vector.load %arg2[%c0, %c0_0] : memref<8x1xf32, #tpu.memory_space<vmem>>, vector<8x1xf32>
    %c0_1 = arith.constant 0 : index
    %c0_2 = arith.constant 0 : index
    %1 = vector.load %arg3[%c0_1, %c0_2] : memref<8x128xf32, #tpu.memory_space<vmem>>, vector<8x128xf32>
    %2 = vector.broadcast %0 : vector<8x1xf32> to vector<8x128xf32>
    %3 = arith.mulf %1, %2 : vector<8x128xf32>
    %c0_3 = arith.constant 0 : index
    %c0_4 = arith.constant 0 : index
    %4 = vector.load %arg5[%c0_3, %c0_4] : memref<8x128xf32, #tpu.memory_space<vmem>>, vector<8x128xf32>
    tpu.vector_store %arg5[%c0_3, %c0_4], %3 {strides = array<i32>} : memref<8x128xf32, #tpu.memory_space<vmem>>, vector<8x128xf32>,
    %c0_5 = arith.constant 0 : index
    %c0_6 = arith.constant 0 : index
    %5 = vector.load %arg4[%c0_5, %c0_6] : memref<8x128xf32, #tpu.memory_space<vmem>>, vector<8x128xf32>
    %6 = vector.broadcast %0 : vector<8x1xf32> to vector<8x128xf32>
    %7 = arith.mulf %5, %6 : vector<8x128xf32>
    %c0_7 = arith.constant 0 : index
    %c0_8 = arith.constant 0 : index
    %8 = vector.load %arg6[%c0_7, %c0_8] : memref<8x128xf32, #tpu.memory_space<vmem>>, vector<8x128xf32>
    tpu.vector_store %arg6[%c0_7, %c0_8], %7 {strides = array<i32>} : memref<8x128xf32, #tpu.memory_space<vmem>>, vector<8x128xf32>,
    return
  }
  func.func @transform_0(%arg0: i32, %arg1: i32) -> (i32, i32) {
    %c0_i32 = arith.constant 0 : i32
    %c0_i32_0 = arith.constant 0 : i32
    return %arg0, %c0_i32 : i32, i32
  }
  func.func @transform_1(%arg0: i32, %arg1: i32) -> (i32, i32) {
    %c0_i32 = arith.constant 0 : i32
    return %arg0, %arg1 : i32, i32
  }
  func.func @transform_2(%arg0: i32, %arg1: i32) -> (i32, i32) {
    %c0_i32 = arith.constant 0 : i32
    return %arg0, %arg1 : i32, i32
  }
  func.func @transform_3(%arg0: i32, %arg1: i32) -> (i32, i32) {
    %c0_i32 = arith.constant 0 : i32
    return %arg0, %arg1 : i32, i32
  }
  func.func @transform_4(%arg0: i32, %arg1: i32) -> (i32, i32) {
    %c0_i32 = arith.constant 0 : i32
    return %arg0, %arg1 : i32, i32
  }
}

</mosaic_0001>

<llo_original>
// kernel: custom-call.1
$region0: #{custom-call.1}
  %s0 = inlined_call_operand.hbm [shape: c64[2,4,16,16], index: 0, kind: input, shape index: {}]
  %s1 = inlined_call_operand.vmem [shape: f32[2,4,16,16], index: 1, kind: output, shape index: {}]
  %s2 = scalar_lea.hbm %s0, 128
  $region1: #{custom-call.1} parent=0
    #allocation0 [shape = 's32[1]{0}', space=sflag, size = 0x4, scoped, tag = 'scoped memory for custom-call.1']
    %3 = vsyncpa [#allocation0], 0
    %s5 = sshll.u32 %s2, 4
    %s6 = int_to_ptr.hbm [resolvable:$true] %s5
    %s7 = sshll.u32 %s1, 4
    %s8 = int_to_ptr.vmem [resolvable:$true] %s7
    %10 = dma.hbm_to_vmem [thread:$0]  %s6, 2048, %s8, [#allocation0]
    %12 = dma.done [#allocation0], 2048
    %13 = vsyncpa [#allocation0], 1

// kernel: custom-call
$region0: #{custom-call}
  %s0 = inlined_call_operand.hbm [shape: c64[2,4,16,16], index: 0, kind: input, shape index: {}]
  %s1 = inlined_call_operand.vmem [shape: f32[2,4,16,16], index: 1, kind: output, shape index: {}]
  $region1: #{custom-call} parent=0
    #allocation0 [shape = 's32[1]{0}', space=sflag, size = 0x4, scoped, tag = 'scoped memory for custom-call']
    %2 = vsyncpa [#allocation0], 0
    %s4 = sshll.u32 %s0, 4
    %s5 = int_to_ptr.hbm [resolvable:$true] %s4
    %s6 = sshll.u32 %s1, 4
    %s7 = int_to_ptr.vmem [resolvable:$true] %s6
    %9 = dma.hbm_to_vmem [thread:$0]  %s5, 2048, %s7, [#allocation0]
    %11 = dma.done [#allocation0], 2048
    %12 = vsyncpa [#allocation0], 1

// kernel: custom-call.2
$region0: #{custom-call.2}
  %s0 = inlined_call_operand.vmem [shape: f32[2,4,16,16], index: 0, kind: input, shape index: {}]
  %s1 = inlined_call_operand.vmem [shape: f32[2,4,16,16], index: 1, kind: input, shape index: {}]
  %s2 = inlined_call_operand.hbm [shape: c64[2,4,16,16], index: 2, kind: output, shape index: {}]
  %s3 = scalar_lea.hbm %s2, 128
  $region1: #{custom-call.2} parent=0
    #allocation0 [shape = 's32[1]{0}', space=sflag, size = 0x4, scoped, tag = 'scoped memory for custom-call.2']
    %4 = vsyncpa [#allocation0], 0
    %s6 = sshll.u32 %s0, 4
    %s7 = int_to_ptr.vmem [resolvable:$true] %s6
    %s8 = sshll.u32 %s2, 4
    %s9 = int_to_ptr.hbm [resolvable:$true] %s8
    %11 = dma.vmem_to_hbm [thread:$0]  %s7, 2048, %s9, [#allocation0]
    %13 = dma.done [#allocation0], 2048
    %14 = vsyncpa [#allocation0], 1
  $region2: #{custom-call.2} parent=0
    #allocation1 [shape = 's32[1]{0}', space=sflag, size = 0x4, scoped, tag = 'scoped memory for custom-call.2']
    %15 = vsyncpa [#allocation1], 0
    %s17 = sshll.u32 %s1, 4
    %s18 = int_to_ptr.vmem [resolvable:$true] %s17
    %s19 = sshll.u32 %s3, 4
    %s20 = int_to_ptr.hbm [resolvable:$true] %s19
    %22 = dma.vmem_to_hbm [thread:$0]  %s18, 2048, %s20, [#allocation1]
    %24 = dma.done [#allocation1], 2048
    %25 = vsyncpa [#allocation1], 1

// kernel: complex_dropout2d.1
$region0: #{complex_dropout2d.1}
  #allocation0 [shape = 'u32[]', space=smem, size = 0x4, offset = 0x4, fixed_abs, tag = 'smem constant byte address 0x4 - core index']
  #allocation1 [shape = 'u32[72,128]{1,0:T(1,128)}', space=vmem, size = 0x9000, scoped, tag = 'internal scratch']
  %s0 = inlined_call_operand.vmem [shape: f32[8,1], index: 0, kind: input, shape index: {}]
  %s1 = inlined_call_operand.vmem [shape: f32[8,256], index: 1, kind: input, shape index: {}, may-alias: {1,3}]
  %s2 = inlined_call_operand.vmem [shape: f32[8,256], index: 2, kind: input, shape index: {}, may-alias: {2,4}]
  %s3 = inlined_call_operand.vmem [shape: f32[8,256], index: 3, kind: output, shape index: {0}, may-alias: {1,3}]
  %s4 = inlined_call_operand.vmem [shape: f32[8,256], index: 4, kind: output, shape index: {1}, may-alias: {2,4}]
  %5 = xla_tuple %s3, %s4
  %s6 = sld [smem:[#allocation0]]
  $region53: #{complex_dropout2d.1} parent=0
    _
  %s8 = ssub.s32 1, %s6
  %s9 = scalar_select 0, %s8, %s6
  loop: start=0, step=1, limit=4
  $region2: #{complex_dropout2d.1} parent=0 // loop_pre_header
    _
  $region3: #{complex_dropout2d.1} parent=0 // loop_header
    %s11 = sphi 0, %s15
    %p12 = scmp.ge.s32.totalorder %s11, 4
    %s18 = sphi 0, %s30
    %s19 = sphi 0, %s26
    %s20 = sphi 0, %s18
    %s21 = sphi 0, %s19
    %s22 = sphi 0, %s20
    %s23 = sphi 0, %s21
    %s33 = sphi 0, %s35
    %s36 = sphi 0, %s33
    %s37 = sphi 0, %s36
    %s53 = sphi 0, %s37
    %s61 = sphi 0, %s63
    %s64 = sphi 0, %s61
    %s65 = sphi 0, %s64
    %s81 = sphi 0, %s65
    %s89 = sphi 0, %s91
    %s92 = sphi 0, %s89
    %s93 = sphi 0, %s92
    %s109 = sphi 0, %s93
    %s117 = sphi 0, %s119
    %s120 = sphi 0, %s117
    %s121 = sphi 0, %s120
    %s137 = sphi 0, %s121
    %s145 = sphi 0, %s147
    %s148 = sphi 0, %s145
    %s149 = sphi 0, %s148
    %s165 = sphi 0, %s149
  $region4: #{complex_dropout2d.1} parent=0 // loop_header_branch
    %14 = sbr.rel (%p12) target = $region8
  $region5: #{complex_dropout2d.1} parent=0 // loop_body
    %s16 = ssub.s32 %s11, 1
    %s17 = ssub.s32 %s11, 2
    %s24 = sadd.s32 1, %s19
    %p25 = scmp.ge.s32.totalorder %s24, 2
    %s26 = scalar_select %p25, 0, %s24
    %s27 = sadd.s32 1, %s18
    %s28 = scalar_select %p25, %s27, %s18
    %p29 = scmp.ge.s32.totalorder %s28, 1
    %s30 = scalar_select %p29, 0, %s28
    %s31 = ssub.s32 %s18, %s30
    %p32 = scmp.eq.s32.totalorder %s31, 0
    %s34 = sadd.s32 %s33, 1
    %s35 = scalar_select %p32, %s33, %s34
    %p38 = pneg %p32
    %p39 = scmp.eq.s32.totalorder %s11, 1
    %p40 = por %p38, %p39
    %p41 = scmp.ne.s32.totalorder %s33, %s36
    %p42 = scmp.eq.s32.totalorder %s11, 0
    %p43 = por %p41, %p42
    %p44 = scmp.ne.s32.totalorder %s33, %s36
    %p45 = scmp.eq.s32.totalorder %s16, 1
    %p46 = por %p44, %p45
    %p47 = scmp.ne.s32.totalorder %s36, %s37
    %p48 = scmp.eq.s32.totalorder %s16, 0
    %p49 = por %p47, %p48
    %p50 = scmp.ne.s32.totalorder %s36, %s37
    %p51 = scmp.eq.s32.totalorder %s17, 1
    %p52 = por %p50, %p51
    %p54 = scmp.ne.s32.totalorder %s37, %s53
    %p55 = scmp.eq.s32.totalorder %s17, 0
    %p56 = por %p54, %p55
    %s57 = ssub.s32 %s18, %s30
    %s58 = ssub.s32 %s19, %s26
    %s59 = sor.u32 %s57, %s58
    %p60 = scmp.eq.s32.totalorder %s59, 0
    %s62 = sadd.s32 %s61, 1
    %s63 = scalar_select %p60, %s61, %s62
    %p66 = pneg %p60
    %p67 = scmp.eq.s32.totalorder %s11, 1
    %p68 = por %p66, %p67
    %p69 = scmp.ne.s32.totalorder %s61, %s64
    %p70 = scmp.eq.s32.totalorder %s11, 0
    %p71 = por %p69, %p70
    %p72 = scmp.ne.s32.totalorder %s61, %s64
    %p73 = scmp.eq.s32.totalorder %s16, 1
    %p74 = por %p72, %p73
    %p75 = scmp.ne.s32.totalorder %s64, %s65
    %p76 = scmp.eq.s32.totalorder %s16, 0
    %p77 = por %p75, %p76
    %p78 = scmp.ne.s32.totalorder %s64, %s65
    %p79 = scmp.eq.s32.totalorder %s17, 1
    %p80 = por %p78, %p79
    %p82 = scmp.ne.s32.totalorder %s65, %s81
    %p83 = scmp.eq.s32.totalorder %s17, 0
    %p84 = por %p82, %p83
    %s85 = ssub.s32 %s18, %s30
    %s86 = ssub.s32 %s19, %s26
    %s87 = sor.u32 %s85, %s86
    %p88 = scmp.eq.s32.totalorder %s87, 0
    %s90 = sadd.s32 %s89, 1
    %s91 = scalar_select %p88, %s89, %s90
    %p94 = pneg %p88
    %p95 = scmp.eq.s32.totalorder %s11, 1
    %p96 = por %p94, %p95
    %p97 = scmp.ne.s32.totalorder %s89, %s92
    %p98 = scmp.eq.s32.totalorder %s11, 0
    %p99 = por %p97, %p98
    %p100 = scmp.ne.s32.totalorder %s89, %s92
    %p101 = scmp.eq.s32.totalorder %s16, 1
    %p102 = por %p100, %p101
    %p103 = scmp.ne.s32.totalorder %s92, %s93
    %p104 = scmp.eq.s32.totalorder %s16, 0
    %p105 = por %p103, %p104
    %p106 = scmp.ne.s32.totalorder %s92, %s93
    %p107 = scmp.eq.s32.totalorder %s17, 1
    %p108 = por %p106, %p107
    %p110 = scmp.ne.s32.totalorder %s93, %s109
    %p111 = scmp.eq.s32.totalorder %s17, 0
    %p112 = por %p110, %p111
    %s113 = ssub.s32 %s18, %s30
    %s114 = ssub.s32 %s19, %s26
    %s115 = sor.u32 %s113, %s114
    %p116 = scmp.eq.s32.totalorder %s115, 0
    %s118 = sadd.s32 %s117, 1
    %s119 = scalar_select %p116, %s117, %s118
    %p122 = pneg %p116
    %p123 = scmp.eq.s32.totalorder %s11, 1
    %p124 = por %p122, %p123
    %p125 = scmp.ne.s32.totalorder %s117, %s120
    %p126 = scmp.eq.s32.totalorder %s11, 0
    %p127 = por %p125, %p126
    %p128 = scmp.ne.s32.totalorder %s117, %s120
    %p129 = scmp.eq.s32.totalorder %s16, 1
    %p130 = por %p128, %p129
    %p131 = scmp.ne.s32.totalorder %s120, %s121
    %p132 = scmp.eq.s32.totalorder %s16, 0
    %p133 = por %p131, %p132
    %p134 = scmp.ne.s32.totalorder %s120, %s121
    %p135 = scmp.eq.s32.totalorder %s17, 1
    %p136 = por %p134, %p135
    %p138 = scmp.ne.s32.totalorder %s121, %s137
    %p139 = scmp.eq.s32.totalorder %s17, 0
    %p140 = por %p138, %p139
    %s141 = ssub.s32 %s18, %s30
    %s142 = ssub.s32 %s19, %s26
    %s143 = sor.u32 %s141, %s142
    %p144 = scmp.eq.s32.totalorder %s143, 0
    %s146 = sadd.s32 %s145, 1
    %s147 = scalar_select %p144, %s145, %s146
    %p150 = pneg %p144
    %p151 = scmp.eq.s32.totalorder %s11, 1
    %p152 = por %p150, %p151
    %p153 = scmp.ne.s32.totalorder %s145, %s148
    %p154 = scmp.eq.s32.totalorder %s11, 0
    %p155 = por %p153, %p154
    %p156 = scmp.ne.s32.totalorder %s145, %s148
    %p157 = scmp.eq.s32.totalorder %s16, 1
    %p158 = por %p156, %p157
    %p159 = scmp.ne.s32.totalorder %s148, %s149
    %p160 = scmp.eq.s32.totalorder %s16, 0
    %p161 = por %p159, %p160
    %p162 = scmp.ne.s32.totalorder %s148, %s149
    %p163 = scmp.eq.s32.totalorder %s17, 1
    %p164 = por %p162, %p163
    %p166 = scmp.ne.s32.totalorder %s149, %s165
    %p167 = scmp.eq.s32.totalorder %s17, 0
    %p168 = por %p166, %p167
    %p169 = scmp.le.s32.totalorder 1, %s11
    %p170 = scmp.lt.s32.totalorder %s11, 3
    %p171 = pnand %p169, %p170
    %p172 = pneg %p171
    // Predicated region
    $region9: #{complex_dropout2d.1} parent=5 // pred_check
      _
    $region10: #{complex_dropout2d.1} parent=5 // pred_check_branch
      %174 = sbr.rel (%p171) target = $region12
    $region11: #{complex_dropout2d.1} parent=5 // pred_region
      %s175 = ssub.s32 %s11, 1
      // Predicated region
      $region13: #{complex_dropout2d.1} parent=11 // pred_check
        %p176 = pneg %p49
      $region14: #{complex_dropout2d.1} parent=11 // pred_check_branch
        %178 = sbr.rel (%p176) target = $region16
      $region15: #{complex_dropout2d.1} parent=11 // pred_region
        %p179 = scmp.lt.s32.totalorder %s20, 0
        %s180 = scalar_select %p179, %s20, 0
        %s181 = smul.addr %s180, 8
        %s182 = scalar_lea.vmem %s0, %s181
      $region16: #{complex_dropout2d.1} parent=11 // pred_fallthru
        _
    $region12: #{complex_dropout2d.1} parent=5 // pred_fallthru
      _
    %p183 = scmp.lt.s32.totalorder %s11, 2
    // Predicated region
    $region17: #{complex_dropout2d.1} parent=5 // pred_check
      %p184 = pneg %p183
    $region18: #{complex_dropout2d.1} parent=5 // pred_check_branch
      %186 = sbr.rel (%p184) target = $region20
    $region19: #{complex_dropout2d.1} parent=5 // pred_region
      // Predicated region
      $region21: #{complex_dropout2d.1} parent=19 // pred_check
        %p187 = pneg %p71
      $region22: #{complex_dropout2d.1} parent=19 // pred_check_branch
        %189 = sbr.rel (%p187) target = $region24
      $region23: #{complex_dropout2d.1} parent=19 // pred_region
        %p190 = scmp.lt.s32.totalorder %s18, 0
        %s191 = scalar_select %p190, %s18, 0
        %p192 = scmp.lt.s32.totalorder %s19, 1
        %s193 = scalar_select %p192, %s19, 1
        %s194 = smul.addr %s191, 2
        %s195 = sadd.s32 %s193, %s194
        %s196 = smul.addr %s195, 8
        %s197 = scalar_lea.vmem %s1, %s196
      $region24: #{complex_dropout2d.1} parent=19 // pred_fallthru
        _
      // Predicated region
      $region25: #{complex_dropout2d.1} parent=19 // pred_check
        %p198 = pneg %p99
      $region26: #{complex_dropout2d.1} parent=19 // pred_check_branch
        %200 = sbr.rel (%p198) target = $region28
      $region27: #{complex_dropout2d.1} parent=19 // pred_region
        %p201 = scmp.lt.s32.totalorder %s18, 0
        %s202 = scalar_select %p201, %s18, 0
        %p203 = scmp.lt.s32.totalorder %s19, 1
        %s204 = scalar_select %p203, %s19, 1
        %s205 = smul.addr %s202, 2
        %s206 = sadd.s32 %s204, %s205
        %s207 = smul.addr %s206, 8
        %s208 = scalar_lea.vmem %s2, %s207
      $region28: #{complex_dropout2d.1} parent=19 // pred_fallthru
        _
    $region20: #{complex_dropout2d.1} parent=5 // pred_fallthru
      _
    %p209 = scmp.le.s32.totalorder 1, %s11
    %p210 = scmp.lt.s32.totalorder %s11, 3
    %p211 = pnand %p209, %p210
    %p212 = pneg %p211
    // Predicated region
    $region29: #{complex_dropout2d.1} parent=5 // pred_check
      _
    $region30: #{complex_dropout2d.1} parent=5 // pred_check_branch
      %214 = sbr.rel (%p211) target = $region32
    $region31: #{complex_dropout2d.1} parent=5 // pred_region
      %s215 = ssub.s32 %s11, 1
      %p216 = scmp.lt.s32.totalorder %s20, 0
      %s217 = scalar_select %p216, %s20, 0
      %s218 = smul.addr %s217, 8
      %s219 = scalar_lea.vmem %s0, %s218
      %p220 = pneg %p49
      %p221 = pneg %p46
      %p222 = scmp.lt.s32.totalorder %s20, 0
      %s223 = scalar_select %p222, %s20, 0
      %p224 = scmp.lt.s32.totalorder %s21, 1
      %s225 = scalar_select %p224, %s21, 1
      %s226 = smul.addr %s223, 2
      %s227 = sadd.s32 %s225, %s226
      %s228 = smul.addr %s227, 8
      %s229 = scalar_lea.vmem %s1, %s228
      %p230 = pneg %p77
      %p231 = pneg %p74
      %p232 = scmp.lt.s32.totalorder %s20, 0
      %s233 = scalar_select %p232, %s20, 0
      %p234 = scmp.lt.s32.totalorder %s21, 1
      %s235 = scalar_select %p234, %s21, 1
      %s236 = smul.addr %s233, 2
      %s237 = sadd.s32 %s235, %s236
      %s238 = smul.addr %s237, 8
      %s239 = scalar_lea.vmem %s2, %s238
      %p240 = pneg %p105
      %p241 = pneg %p102
      %p242 = pneg %p133
      %p243 = pneg %p130
      %p244 = scmp.lt.s32.totalorder %s20, 0
      %s245 = scalar_select %p244, %s20, 0
      %p246 = scmp.lt.s32.totalorder %s21, 1
      %s247 = scalar_select %p246, %s21, 1
      %s248 = smul.addr %s245, 2
      %s249 = sadd.s32 %s247, %s248
      %s250 = smul.addr %s249, 8
      %s251 = scalar_lea.vmem %s3, %s250
      %p252 = pneg %p161
      %p253 = pneg %p158
      %p254 = scmp.lt.s32.totalorder %s20, 0
      %s255 = scalar_select %p254, %s20, 0
      %p256 = scmp.lt.s32.totalorder %s21, 1
      %s257 = scalar_select %p256, %s21, 1
      %s258 = smul.addr %s255, 2
      %s259 = sadd.s32 %s257, %s258
      %s260 = smul.addr %s259, 8
      %s261 = scalar_lea.vmem %s4, %s260
      %p262 = scmp.lt.s32.totalorder %s20, 0
      %s263 = scalar_select %p262, %s20, 0
      %s264 = smul.addr %s263, 8
      %s265 = scalar_lea.vmem %s0, %s264
      %p266 = scmp.lt.s32.totalorder %s20, 0
      %s267 = scalar_select %p266, %s20, 0
      %p268 = scmp.lt.s32.totalorder %s21, 1
      %s269 = scalar_select %p268, %s21, 1
      %s270 = smul.addr %s267, 2
      %s271 = sadd.s32 %s269, %s270
      %s272 = smul.addr %s271, 8
      %s273 = scalar_lea.vmem %s1, %s272
      %p274 = scmp.lt.s32.totalorder %s20, 0
      %s275 = scalar_select %p274, %s20, 0
      %p276 = scmp.lt.s32.totalorder %s21, 1
      %s277 = scalar_select %p276, %s21, 1
      %s278 = smul.addr %s275, 2
      %s279 = sadd.s32 %s277, %s278
      %s280 = smul.addr %s279, 8
      %s281 = scalar_lea.vmem %s2, %s280
      %p282 = scmp.lt.s32.totalorder %s20, 0
      %s283 = scalar_select %p282, %s20, 0
      %p284 = scmp.lt.s32.totalorder %s21, 1
      %s285 = scalar_select %p284, %s21, 1
      %s286 = smul.addr %s283, 2
      %s287 = sadd.s32 %s285, %s286
      %s288 = smul.addr %s287, 8
      %s289 = scalar_lea.vmem %s3, %s288
      %p290 = scmp.lt.s32.totalorder %s20, 0
      %s291 = scalar_select %p290, %s20, 0
      %p292 = scmp.lt.s32.totalorder %s21, 1
      %s293 = scalar_select %p292, %s21, 1
      %s294 = smul.addr %s291, 2
      %s295 = sadd.s32 %s293, %s294
      %s296 = smul.addr %s295, 8
      %s297 = scalar_lea.vmem %s4, %s296
      %v298 = vld [vmem:[%s265] sm:$0xff]
      %v299 = vld [vmem:[%s273] sm:$0xff]
      %301 = vset.pattern.permute.xlu0 0
      %302 = vperm.xlu0 %301, %v298
      %v303 = vpop.permute.xlu0 %302
      %v305 = vmul.f32 %v299, %v303
      %306 = vst [vmem:[%s289] sm:$0xff] %v305
      %v307 = vld [vmem:[%s281] sm:$0xff]
      %v308 = vmul.f32 %v307, %v303
      %309 = vst [vmem:[%s297] sm:$0xff] %v308
      %p310 = scmp.lt.s32.totalorder %s20, 0
      %s311 = scalar_select %p310, %s20, 0
      %p312 = scmp.lt.s32.totalorder %s21, 1
      %s313 = scalar_select %p312, %s21, 1
      %s314 = smul.addr %s311, 2
      %s315 = sadd.s32 %s313, %s314
      %s316 = smul.addr %s315, 8
      %s317 = scalar_lea.vmem %s3, %s316
      %p318 = scmp.lt.s32.totalorder %s20, 0
      %s319 = scalar_select %p318, %s20, 0
      %p320 = scmp.lt.s32.totalorder %s21, 1
      %s321 = scalar_select %p320, %s21, 1
      %s322 = smul.addr %s319, 2
      %s323 = sadd.s32 %s321, %s322
      %s324 = smul.addr %s323, 8
      %s325 = scalar_lea.vmem %s4, %s324
      // Predicated region
      $region33: #{complex_dropout2d.1} parent=31 // pred_check
        %p326 = pneg %p130
      $region34: #{complex_dropout2d.1} parent=31 // pred_check_branch
        %328 = sbr.rel (%p326) target = $region36
      $region35: #{complex_dropout2d.1} parent=31 // pred_region
        _
      $region36: #{complex_dropout2d.1} parent=31 // pred_fallthru
        _
      // Predicated region
      $region37: #{complex_dropout2d.1} parent=31 // pred_check
        %p329 = pneg %p158
      $region38: #{complex_dropout2d.1} parent=31 // pred_check_branch
        %331 = sbr.rel (%p329) target = $region40
      $region39: #{complex_dropout2d.1} parent=31 // pred_region
        _
      $region40: #{complex_dropout2d.1} parent=31 // pred_fallthru
        _
    $region32: #{complex_dropout2d.1} parent=5 // pred_fallthru
      _
    %p332 = scmp.le.s32.totalorder 2, %s11
    // Predicated region
    $region41: #{complex_dropout2d.1} parent=5 // pred_check
      %p333 = pneg %p332
    $region42: #{complex_dropout2d.1} parent=5 // pred_check_branch
      %335 = sbr.rel (%p333) target = $region44
    $region43: #{complex_dropout2d.1} parent=5 // pred_region
      %s336 = ssub.s32 %s11, 2
      // Predicated region
      $region45: #{complex_dropout2d.1} parent=43 // pred_check
        %p337 = pneg %p136
      $region46: #{complex_dropout2d.1} parent=43 // pred_check_branch
        %339 = sbr.rel (%p337) target = $region48
      $region47: #{complex_dropout2d.1} parent=43 // pred_region
        %p340 = scmp.lt.s32.totalorder %s22, 0
        %s341 = scalar_select %p340, %s22, 0
        %p342 = scmp.lt.s32.totalorder %s23, 1
        %s343 = scalar_select %p342, %s23, 1
        %s344 = smul.addr %s341, 2
        %s345 = sadd.s32 %s343, %s344
        %s346 = smul.addr %s345, 8
        %s347 = scalar_lea.vmem %s3, %s346
      $region48: #{complex_dropout2d.1} parent=43 // pred_fallthru
        _
      // Predicated region
      $region49: #{complex_dropout2d.1} parent=43 // pred_check
        %p348 = pneg %p164
      $region50: #{complex_dropout2d.1} parent=43 // pred_check_branch
        %350 = sbr.rel (%p348) target = $region52
      $region51: #{complex_dropout2d.1} parent=43 // pred_region
        %p351 = scmp.lt.s32.totalorder %s22, 0
        %s352 = scalar_select %p351, %s22, 0
        %p353 = scmp.lt.s32.totalorder %s23, 1
        %s354 = scalar_select %p353, %s23, 1
        %s355 = smul.addr %s352, 2
        %s356 = sadd.s32 %s354, %s355
        %s357 = smul.addr %s356, 8
        %s358 = scalar_lea.vmem %s4, %s357
      $region52: #{complex_dropout2d.1} parent=43 // pred_fallthru
        _
    $region44: #{complex_dropout2d.1} parent=5 // pred_fallthru
      _
  $region6: #{complex_dropout2d.1} parent=0 // loop_footer
    %s15 = sadd.s32 1, %s11
  $region7: #{complex_dropout2d.1} parent=0 // loop_footer_branch
    %10 = sbr.rel target = $region3
  $region8: #{complex_dropout2d.1} parent=0 // loop_exit
    _

</llo_original>
